<compile_context>
chip_gen: v7x
topology: tpu7x:2x2x1
jax: 0.10.0
libtpu: 0.0.40
codegen_flags: <defaults>
</compile_context>

<pallas_src>
import jax
import jax.numpy as jnp
from jax.experimental import pallas as pl
from jax.experimental.pallas import tpu as pltpu

EPS = 1e-6


def _round_up(n, m):
    return (n + m - 1) // m * m


def _sublayer_connection_kernel(x_ref, gamma_ref, beta_ref, w_ref, b_ref, o_ref):
    # One (TM, H) row tile per grid step; rows are fully independent.
    x = x_ref[...].astype(jnp.float32)                    # single f32 working copy
    gamma = gamma_ref[...].astype(jnp.float32)            # (1, H)
    beta = beta_ref[...].astype(jnp.float32)              # (1, H)

    H = x.shape[-1]

    # LayerNorm exactly as the PyTorch module: unbiased std, eps added to std.
    mean = jnp.mean(x, axis=-1, keepdims=True)            # (TM, 1)
    centered = x - mean
    var_unbiased = jnp.sum(centered * centered, axis=-1, keepdims=True) / (H - 1)
    std = jnp.sqrt(var_unbiased)
    inv = 1.0 / (std + EPS)                               # exact; one divide per row
    normed = gamma * (centered * inv) + beta              # (TM, H) f32

    # Sublayer: dense (H -> H) on the MXU. Cast activations to the weight dtype
    # so bf16 weights use the bf16 MXU path with f32 accumulation.
    w = w_ref[...]
    sub = jnp.dot(normed.astype(w.dtype), w,
                  preferred_element_type=jnp.float32)
    sub = sub + b_ref[...].astype(jnp.float32)

    # Dropout (eval mode) is identity; residual reuses the same f32 x tile.
    # TODO(synk): training-mode stochastic dropout (pltpu.prng_random_bits + 1/(1-p)).
    o_ref[...] = (x + sub).astype(o_ref.dtype)


def sublayer_connection(x, gamma, beta, w, b, *, row_tile=512):
    """x: (B, S, H); gamma/beta: (H,); w: (H, H); b: (H,).

    Fused residual + LayerNorm + dense sublayer (dropout in eval mode).
    H should be a multiple of 128 in production for lane-dense stores / full MXU.
    """
    B, S, H = x.shape
    N = B * S

    # Row tile: multiple of 8 sublanes, capped at row_tile; pad N so tiles divide.
    TM = min(row_tile, _round_up(N, 8))
    Np = _round_up(N, TM)

    x2d = x.reshape(N, H)
    if Np != N:
        x2d = jnp.pad(x2d, ((0, Np - N), (0, 0)))

    gamma2d = gamma.reshape(1, H)
    beta2d = beta.reshape(1, H)
    b2d = b.reshape(1, H)

    cost = pl.CostEstimate(
        flops=2 * Np * H * H,
        transcendentals=2 * Np,  # sqrt + reciprocal per row
        bytes_accessed=2 * Np * H * x.dtype.itemsize + H * H * w.dtype.itemsize,
    )

    out = pl.pallas_call(
        _sublayer_connection_kernel,
        out_shape=jax.ShapeDtypeStruct((Np, H), x.dtype),
        grid_spec=pltpu.PrefetchScalarGridSpec(
            num_scalar_prefetch=0,
            grid=(Np // TM,),
            in_specs=[
                pl.BlockSpec((TM, H), lambda i: (i, 0)),  # x row tile (pipelined)
                pl.BlockSpec((1, H), lambda i: (0, 0)),   # gamma (VMEM-resident)
                pl.BlockSpec((1, H), lambda i: (0, 0)),   # beta  (VMEM-resident)
                pl.BlockSpec((H, H), lambda i: (0, 0)),   # W     (VMEM-resident)
                pl.BlockSpec((1, H), lambda i: (0, 0)),   # bias  (VMEM-resident)
            ],
            out_specs=pl.BlockSpec((TM, H), lambda i: (i, 0)),
        ),
        compiler_params=pltpu.CompilerParams(
            dimension_semantics=("parallel",),  # row tiles shard across TCs on v7x
        ),
        cost_estimate=cost,
    )(x2d, gamma2d, beta2d, w, b2d)

    if Np != N:
        out = out[:N]
    return out.reshape(B, S, H)


if __name__ == "__main__":
    B, S, H = 2, 8, 128  # H multiple of 128 -> lane-dense output, full MXU columns
    key = jax.random.PRNGKey(0)
    kx, kw, kb = jax.random.split(key, 3)

    x = jax.random.normal(kx, (B, S, H), dtype=jnp.float32)

    # LayerNorm params exactly as in __init__: ones / zeros over size=[H].
    gamma = jnp.ones((H,), dtype=jnp.float32)
    beta = jnp.zeros((H,), dtype=jnp.float32)

    # Deterministic synthetic sublayer (dense H -> H).
    w = jax.random.normal(kw, (H, H), dtype=jnp.float32) * 0.02
    b = jax.random.normal(kb, (H,), dtype=jnp.float32) * 0.02

    out = sublayer_connection(x, gamma, beta, w, b)
    jax.block_until_ready(out)

    # Reference check in plain JAX (same math as the PyTorch module).
    mean = jnp.mean(x, axis=-1, keepdims=True)
    cen = x - mean
    std = jnp.sqrt(jnp.sum(cen * cen, axis=-1, keepdims=True) / (H - 1))
    normed = gamma * cen / (std + EPS) + beta
    ref = x + (normed @ w + b)

    err = jnp.max(jnp.abs(out - ref))
    assert jnp.allclose(out, ref, atol=2e-3, rtol=2e-3), f"mismatch vs reference (max abs err {err})"

    print("KERNEL_OK")
</pallas_src>

<mosaic_0001>
module attributes {stable_mosaic.version = 11 : i64} {
  func.func @_sublayer_connection_kernel(%arg0: i32, %arg1: memref<16x128xf32, #tpu.memory_space<vmem>>, %arg2: memref<1x128xf32, #tpu.memory_space<vmem>>, %arg3: memref<1x128xf32, #tpu.memory_space<vmem>>, %arg4: memref<128x128xf32, #tpu.memory_space<vmem>>, %arg5: memref<1x128xf32, #tpu.memory_space<vmem>>, %arg6: memref<16x128xf32, #tpu.memory_space<vmem>>) attributes {dimension_semantics = [#tpu.dimension_semantics<parallel>], iteration_bounds = array<i64: 1>, scalar_prefetch = 0 : i64, scratch_operands = 0 : i64, tpu.core_type = #tpu.core_type<tc>, window_params = [{transform_indices = @transform_0, window_bounds = array<i64: 16, 128>}, {pipeline_mode = #tpu.pipeline_mode<synchronous>, transform_indices = @transform_1, window_bounds = array<i64: 1, 128>}, {pipeline_mode = #tpu.pipeline_mode<synchronous>, transform_indices = @transform_2, window_bounds = array<i64: 1, 128>}, {pipeline_mode = #tpu.pipeline_mode<synchronous>, transform_indices = @transform_3, window_bounds = array<i64: 128, 128>}, {pipeline_mode = #tpu.pipeline_mode<synchronous>, transform_indices = @transform_4, window_bounds = array<i64: 1, 128>}, {transform_indices = @transform_5, window_bounds = array<i64: 16, 128>}]} {
    %c0 = arith.constant 0 : index
    %c0_0 = arith.constant 0 : index
    %0 = vector.load %arg1[%c0, %c0_0] : memref<16x128xf32, #tpu.memory_space<vmem>>, vector<16x128xf32>
    %c0_1 = arith.constant 0 : index
    %c0_2 = arith.constant 0 : index
    %1 = vector.load %arg2[%c0_1, %c0_2] : memref<1x128xf32, #tpu.memory_space<vmem>>, vector<1x128xf32>
    %c0_3 = arith.constant 0 : index
    %c0_4 = arith.constant 0 : index
    %2 = vector.load %arg3[%c0_3, %c0_4] : memref<1x128xf32, #tpu.memory_space<vmem>>, vector<1x128xf32>
    %cst = arith.constant dense<0.000000e+00> : vector<16xf32>
    %3 = vector.multi_reduction <add>, %0, %cst [1] : vector<16x128xf32> to vector<16xf32>
    %4 = vector.shape_cast %3 : vector<16xf32> to vector<16x1xf32>
    %cst_5 = arith.constant 1.280000e+02 : f32
    %5 = vector.broadcast %cst_5 : f32 to vector<16x1xf32>
    %6 = arith.divf %4, %5 : vector<16x1xf32>
    %7 = vector.broadcast %6 : vector<16x1xf32> to vector<16x128xf32>
    %8 = arith.subf %0, %7 : vector<16x128xf32>
    %9 = arith.mulf %8, %8 : vector<16x128xf32>
    %cst_6 = arith.constant dense<0.000000e+00> : vector<16xf32>
    %10 = vector.multi_reduction <add>, %9, %cst_6 [1] : vector<16x128xf32> to vector<16xf32>
    %11 = vector.shape_cast %10 : vector<16xf32> to vector<16x1xf32>
    %cst_7 = arith.constant 1.270000e+02 : f32
    %12 = vector.broadcast %cst_7 : f32 to vector<16x1xf32>
    %13 = arith.divf %11, %12 : vector<16x1xf32>
    %14 = math.sqrt %13 : vector<16x1xf32>
    %cst_8 = arith.constant 9.99999997E-7 : f32
    %15 = vector.broadcast %cst_8 : f32 to vector<16x1xf32>
    %16 = arith.addf %14, %15 : vector<16x1xf32>
    %cst_9 = arith.constant 1.000000e+00 : f32
    %17 = vector.broadcast %cst_9 : f32 to vector<16x1xf32>
    %18 = arith.divf %17, %16 : vector<16x1xf32>
    %19 = vector.broadcast %18 : vector<16x1xf32> to vector<16x128xf32>
    %20 = arith.mulf %8, %19 : vector<16x128xf32>
    %21 = vector.broadcast %1 : vector<1x128xf32> to vector<16x128xf32>
    %22 = arith.mulf %21, %20 : vector<16x128xf32>
    %23 = vector.broadcast %2 : vector<1x128xf32> to vector<16x128xf32>
    %24 = arith.addf %22, %23 : vector<16x128xf32>
    %c0_10 = arith.constant 0 : index
    %c0_11 = arith.constant 0 : index
    %25 = vector.load %arg4[%c0_10, %c0_11] : memref<128x128xf32, #tpu.memory_space<vmem>>, vector<128x128xf32>
    %cst_12 = arith.constant dense<0.000000e+00> : vector<16x128xf32>
    %26 = tpu.matmul %24, %25, %cst_12 {dimension_numbers = #tpu.dot_dimension_numbers<[1], [0], [0], [1], [0, 0, 1, 1], [], []>} : vector<16x128xf32>, vector<128x128xf32>, vector<16x128xf32> -> vector<16x128xf32>
    %c0_13 = arith.constant 0 : index
    %c0_14 = arith.constant 0 : index
    %27 = vector.load %arg5[%c0_13, %c0_14] : memref<1x128xf32, #tpu.memory_space<vmem>>, vector<1x128xf32>
    %28 = vector.broadcast %27 : vector<1x128xf32> to vector<16x128xf32>
    %29 = arith.addf %26, %28 : vector<16x128xf32>
    %30 = arith.addf %0, %29 : vector<16x128xf32>
    %c0_15 = arith.constant 0 : index
    %c0_16 = arith.constant 0 : index
    %31 = vector.load %arg6[%c0_15, %c0_16] : memref<16x128xf32, #tpu.memory_space<vmem>>, vector<16x128xf32>
    tpu.vector_store %arg6[%c0_15, %c0_16], %30 {strides = array<i32>} : memref<16x128xf32, #tpu.memory_space<vmem>>, vector<16x128xf32>,
    return
  }
  func.func @transform_0(%arg0: i32) -> (i32, i32) {
    %c0_i32 = arith.constant 0 : i32
    %c0_i32_0 = arith.constant 0 : i32
    return %arg0, %c0_i32 : i32, i32
  }
  func.func @transform_1(%arg0: i32) -> (i32, i32) {
    %c0_i32 = arith.constant 0 : i32
    %c0_i32_0 = arith.constant 0 : i32
    %c0_i32_1 = arith.constant 0 : i32
    return %c0_i32, %c0_i32_0 : i32, i32
  }
  func.func @transform_2(%arg0: i32) -> (i32, i32) {
    %c0_i32 = arith.constant 0 : i32
    %c0_i32_0 = arith.constant 0 : i32
    %c0_i32_1 = arith.constant 0 : i32
    return %c0_i32, %c0_i32_0 : i32, i32
  }
  func.func @transform_3(%arg0: i32) -> (i32, i32) {
    %c0_i32 = arith.constant 0 : i32
    %c0_i32_0 = arith.constant 0 : i32
    %c0_i32_1 = arith.constant 0 : i32
    return %c0_i32, %c0_i32_0 : i32, i32
  }
  func.func @transform_4(%arg0: i32) -> (i32, i32) {
    %c0_i32 = arith.constant 0 : i32
    %c0_i32_0 = arith.constant 0 : i32
    %c0_i32_1 = arith.constant 0 : i32
    return %c0_i32, %c0_i32_0 : i32, i32
  }
  func.func @transform_5(%arg0: i32) -> (i32, i32) {
    %c0_i32 = arith.constant 0 : i32
    %c0_i32_0 = arith.constant 0 : i32
    return %arg0, %c0_i32 : i32, i32
  }
}

</mosaic_0001>

<llo_original>
// kernel: tpu_custom_call.1
$region0: #{tpu_custom_call.1}
  #allocation0 [shape = 'u32[]', space=smem, size = 0x4, offset = 0x4, fixed_abs, tag = 'smem constant byte address 0x4 - core index']
  #allocation1 [shape = 'u32[144,128]{1,0:T(1,128)}', space=vmem, size = 0x12000, scoped, tag = 'internal scratch']
  %s0 = inlined_call_operand.hbm [shape: f32[16,128], index: 0, kind: input, shape index: {}]
  %s1 = inlined_call_operand.vmem [shape: f32[1,128], index: 1, kind: input, shape index: {}]
  %s2 = inlined_call_operand.vmem [shape: f32[1,128], index: 2, kind: input, shape index: {}]
  %s3 = inlined_call_operand.hbm [shape: f32[128,128], index: 3, kind: input, shape index: {}]
  %s4 = inlined_call_operand.vmem [shape: f32[1,128], index: 4, kind: input, shape index: {}]
  %s5 = inlined_call_operand.hbm [shape: f32[16,128], index: 5, kind: output, shape index: {}]
  %s6 = sld [smem:[#allocation0]]
  $region38: #{tpu_custom_call.1} parent=0
    _
  %s8 = ssub.s32 1, %s6
  %s9 = scalar_select 0, %s8, %s6
  $region1: #{tpu_custom_call.1} parent=0
    #allocation2 [shape = 'u8[8192]{0}', space=vmem, size = 0x2000, scoped, tag = 'input window, operand 0, single buffered']
    #allocation3 [shape = 's32[1]{0}', space=sflag, size = 0x4, scoped, tag = 'scoped memory for tpu_custom_call.1']
    #allocation4 [shape = 's32[1]{0}', space=sflag, size = 0x4, scoped, tag = 'scoped memory for tpu_custom_call.1']
    #allocation5 [shape = 'u8[65536]{0}', space=vmem, size = 0x10000, scoped, tag = 'input window, operand 3, single buffered']
    #allocation6 [shape = 's32[1]{0}', space=sflag, size = 0x4, scoped, tag = 'scoped memory for tpu_custom_call.1']
    #allocation7 [shape = 'u8[8192]{0}', space=vmem, size = 0x2000, scoped, tag = 'output window, operand 0, single buffered']
    %10 = vsyncpa [#allocation3], 0
    %11 = vsyncpa [#allocation6], 0
    %12 = vsyncpa [#allocation4], 0
    // Predicated region
    $region2: #{tpu_custom_call.1} parent=1 // pred_check
      _
    $region3: #{tpu_custom_call.1} parent=1 // pred_check_branch
      %14 = sbr.rel (0) target = $region5
    $region4: #{tpu_custom_call.1} parent=1 // pred_region
      %s16 = ssub.s32 256, 256
      %17 = vsyncadd [#allocation3], %s16
      %s18 = sshll.u32 [#allocation2], 4
      %s19 = int_to_ptr.vmem [resolvable:$true] %s18
      %24 = dma.hbm_to_vmem [thread:$0]  %s0, 256, %s19, [#allocation3], 128, 128, 8
    $region5: #{tpu_custom_call.1} parent=1 // pred_fallthru
      _
    // Predicated region
    $region6: #{tpu_custom_call.1} parent=1 // pred_check
      _
    $region7: #{tpu_custom_call.1} parent=1 // pred_check_branch
      %26 = sbr.rel (0) target = $region9
    $region8: #{tpu_custom_call.1} parent=1 // pred_region
      _
    $region9: #{tpu_custom_call.1} parent=1 // pred_fallthru
      _
    // Predicated region
    $region10: #{tpu_custom_call.1} parent=1 // pred_check
      _
    $region11: #{tpu_custom_call.1} parent=1 // pred_check_branch
      %28 = sbr.rel (0) target = $region13
    $region12: #{tpu_custom_call.1} parent=1 // pred_region
      _
    $region13: #{tpu_custom_call.1} parent=1 // pred_fallthru
      _
    // Predicated region
    $region14: #{tpu_custom_call.1} parent=1 // pred_check
      _
    $region15: #{tpu_custom_call.1} parent=1 // pred_check_branch
      %30 = sbr.rel (0) target = $region17
    $region16: #{tpu_custom_call.1} parent=1 // pred_region
      %s32 = ssub.s32 2048, 2048
      %33 = vsyncadd [#allocation6], %s32
      %s34 = sshll.u32 [#allocation5], 4
      %s35 = int_to_ptr.vmem [resolvable:$true] %s34
      %40 = dma.hbm_to_vmem [thread:$0]  %s3, 2048, %s35, [#allocation6], 128, 128, 8
    $region17: #{tpu_custom_call.1} parent=1 // pred_fallthru
      _
    // Predicated region
    $region18: #{tpu_custom_call.1} parent=1 // pred_check
      _
    $region19: #{tpu_custom_call.1} parent=1 // pred_check_branch
      %42 = sbr.rel (0) target = $region21
    $region20: #{tpu_custom_call.1} parent=1 // pred_region
      _
    $region21: #{tpu_custom_call.1} parent=1 // pred_fallthru
      _
    // Predicated region
    $region22: #{tpu_custom_call.1} parent=1 // pred_check
      _
    $region23: #{tpu_custom_call.1} parent=1 // pred_check_branch
      %44 = sbr.rel (0) target = $region25
    $region24: #{tpu_custom_call.1} parent=1 // pred_region
      %45 = dma.done [#allocation3], 256
    $region25: #{tpu_custom_call.1} parent=1 // pred_fallthru
      _
    // Predicated region
    $region26: #{tpu_custom_call.1} parent=1 // pred_check
      _
    $region27: #{tpu_custom_call.1} parent=1 // pred_check_branch
      %47 = sbr.rel (0) target = $region29
    $region28: #{tpu_custom_call.1} parent=1 // pred_region
      %48 = dma.done [#allocation6], 2048
    $region29: #{tpu_custom_call.1} parent=1 // pred_fallthru
      _
    %v49 = vld [vmem:[#allocation2] sm:$0xff]
    %v50 = vld [vmem:[#allocation2 + $0x8] sm:$0xff]
    %v51 = vld [vmem:[%s1] sm:$0x1]
    %v52 = vld [vmem:[%s2] sm:$0x1]
    %53 = vadd.xlane.f32.xlu0 %v49
    %v54 = vpop.xlane.xlu0 %53
    %55 = vadd.xlane.f32.xlu0 %v50
    %v56 = vpop.xlane.xlu0 %55
    %v57 = vrcp.pop 128.0
    %v58 = vmul.f32 %v54, %v57
    %v59 = vmul.f32 %v56, %v57
    %v60 = vsub.f32 %v49, %v58
    %v61 = vsub.f32 %v50, %v59
    %v62 = vmul.f32 %v60, %v60
    %v63 = vmul.f32 %v61, %v61
    %64 = vadd.xlane.f32.xlu0 %v62
    %v65 = vpop.xlane.xlu0 %64
    %66 = vadd.xlane.f32.xlu0 %v63
    %v67 = vpop.xlane.xlu0 %66
    %v68 = vrcp.pop 127.0
    %v69 = vmul.f32 %v65, %v68
    %v70 = vmul.f32 %v67, %v68
    %v71 = vrsqrt.pop %v69
    %v72 = vmul.f32 %v69, %v71
    %vm73 = vcmp.eq.f32.partialorder %v69, inf
    %v74 = vsel %vm73, %v69, %v72
    %vm75 = vcmp.eq.f32.partialorder %v69, 0.0
    %v76 = vand.u32 %v69, 2147483648
    %v77 = vsel %vm75, %v76, %v74
    %v78 = vrsqrt.pop %v70
    %v79 = vmul.f32 %v70, %v78
    %vm80 = vcmp.eq.f32.partialorder %v70, inf
    %v81 = vsel %vm80, %v70, %v79
    %vm82 = vcmp.eq.f32.partialorder %v70, 0.0
    %v83 = vand.u32 %v70, 2147483648
    %v84 = vsel %vm82, %v83, %v81
    %v85 = vadd.f32 %v77, 1e-06
    %v86 = vadd.f32 %v84, 1e-06
    %v87 = vrcp.pop %v85
    %v88 = vmul.f32 1.0, %v87
    %v89 = vrcp.pop %v86
    %v90 = vmul.f32 1.0, %v89
    %v91 = vmul.f32 %v60, %v88
    %v92 = vmul.f32 %v61, %v90
    %v94 = vlaneseq
    %v95 = vshrl.u32 %v94, 7
    %v96 = vsub.s32 0, %v95
    %v97 = vrot.slane %v51, %v96
    %v99 = vmul.f32 %v97, %v91
    %v100 = vmul.f32 %v97, %v92
    %v102 = vlaneseq
    %v103 = vshrl.u32 %v102, 7
    %v104 = vsub.s32 0, %v103
    %v105 = vrot.slane %v52, %v104
    %v107 = vadd.f32 %v99, %v105
    %v108 = vadd.f32 %v100, %v105
    %v109 = vld [vmem:[#allocation5] sm:$0xff]
    %v110 = vld [vmem:[#allocation5 + $0x8] sm:$0xff]
    %v111 = vld [vmem:[#allocation5 + $0x10] sm:$0xff]
    %v112 = vld [vmem:[#allocation5 + $0x18] sm:$0xff]
    %v113 = vld [vmem:[#allocation5 + $0x20] sm:$0xff]
    %v114 = vld [vmem:[#allocation5 + $0x28] sm:$0xff]
    %v115 = vld [vmem:[#allocation5 + $0x30] sm:$0xff]
    %v116 = vld [vmem:[#allocation5 + $0x38] sm:$0xff]
    %v117 = vld [vmem:[#allocation5 + $0x40] sm:$0xff]
    %v118 = vld [vmem:[#allocation5 + $0x48] sm:$0xff]
    %v119 = vld [vmem:[#allocation5 + $0x50] sm:$0xff]
    %v120 = vld [vmem:[#allocation5 + $0x58] sm:$0xff]
    %v121 = vld [vmem:[#allocation5 + $0x60] sm:$0xff]
    %v122 = vld [vmem:[#allocation5 + $0x68] sm:$0xff]
    %v123 = vld [vmem:[#allocation5 + $0x70] sm:$0xff]
    %v124 = vld [vmem:[#allocation5 + $0x78] sm:$0xff]
    %v125 = vld [vmem:[%s4] sm:$0x1]
    %v127 = vlaneseq
    %v128 = vshrl.u32 %v127, 7
    %v129 = vsub.s32 0, %v128
    %v130 = vrot.slane %v125, %v129
    %132 = vmatprep.subr.mxu0 0.0
    %133 = vmatpush1.msra.mxu0 %v109
    %134 = vmatprep.subr.mxu0 0.0
    %135 = vmatpush1.msra.mxu0 %v110
    %136 = vmatprep.subr.mxu0 0.0
    %137 = vmatpush1.msra.mxu0 %v111
    %138 = vmatprep.subr.mxu0 0.0
    %139 = vmatpush1.msra.mxu0 %v112
    %140 = vmatprep.subr.mxu0 0.0
    %141 = vmatpush1.msra.mxu0 %v113
    %142 = vmatprep.subr.mxu0 0.0
    %143 = vmatpush1.msra.mxu0 %v114
    %144 = vmatprep.subr.mxu0 0.0
    %145 = vmatpush1.msra.mxu0 %v115
    %146 = vmatprep.subr.mxu0 0.0
    %147 = vmatpush1.msra.mxu0 %v116
    %148 = vmatprep.subr.mxu0 0.0
    %149 = vmatpush1.msra.mxu0 %v117
    %150 = vmatprep.subr.mxu0 0.0
    %151 = vmatpush1.msra.mxu0 %v118
    %152 = vmatprep.subr.mxu0 0.0
    %153 = vmatpush1.msra.mxu0 %v119
    %154 = vmatprep.subr.mxu0 0.0
    %155 = vmatpush1.msra.mxu0 %v120
    %156 = vmatprep.subr.mxu0 0.0
    %157 = vmatpush1.msra.mxu0 %v121
    %158 = vmatprep.subr.mxu0 0.0
    %159 = vmatpush1.msra.mxu0 %v122
    %160 = vmatprep.subr.mxu0 0.0
    %161 = vmatpush1.msra.mxu0 %v123
    %162 = vmatprep.subr.mxu0 0.0
    %163 = vmatpush1.msra.mxu0 %v124
    %164 = vmatprep.subr.mxu0 0.0
    %165 = vmatpush1.msra.mxu0 0.0
    %166 = vmatprep.subr.mxu0 0.0
    %167 = vmatpush1.msra.mxu0 0.0
    %168 = vmatprep.subr.mxu0 0.0
    %169 = vmatpush1.msra.mxu0 0.0
    %170 = vmatprep.subr.mxu0 0.0
    %171 = vmatpush1.msra.mxu0 0.0
    %172 = vmatprep.subr.mxu0 0.0
    %173 = vmatpush1.msra.mxu0 0.0
    %174 = vmatprep.subr.mxu0 0.0
    %175 = vmatpush1.msra.mxu0 0.0
    %176 = vmatprep.subr.mxu0 0.0
    %177 = vmatpush1.msra.mxu0 0.0
    %178 = vmatprep.subr.mxu0 0.0
    %179 = vmatpush1.msra.mxu0 0.0
    %180 = vmatprep.subr.mxu0 0.0
    %181 = vmatpush1.msra.mxu0 0.0
    %182 = vmatprep.subr.mxu0 0.0
    %183 = vmatpush1.msra.mxu0 0.0
    %184 = vmatprep.subr.mxu0 0.0
    %185 = vmatpush1.msra.mxu0 0.0
    %186 = vmatprep.subr.mxu0 0.0
    %187 = vmatpush1.msra.mxu0 0.0
    %188 = vmatprep.subr.mxu0 0.0
    %189 = vmatpush1.msra.mxu0 0.0
    %190 = vmatprep.subr.mxu0 0.0
    %191 = vmatpush1.msra.mxu0 0.0
    %192 = vmatprep.subr.mxu0 0.0
    %193 = vmatpush1.msra.mxu0 0.0
    %194 = vmatprep.subr.mxu0 0.0
    %195 = vmatpush1.msra.mxu0 0.0
    %196 = vmatprep.mubr.f32.mxu0 0.0
    %197 = vmatmul.mubr.f32.gmra.mrb[0].mxu0 %v107
    %v198 = vpop.f32.mrb[0].mxu0
    %v199 = vadd.f32 %v130, %v198
    %v200 = vpop.f32.mrb[0].mxu0
    %201 = vmatprep.mubr.f32.mxu0 0.0
    %202 = vmatmul.mubr.f32.gmra.mrb[0].mxu0 %v108
    %v203 = vpop.f32.mrb[0].mxu0
    %v204 = vadd.f32 %v130, %v203
    %v205 = vpop.f32.mrb[0].mxu0
    %206 = vdwg.mxu0
    %v207 = vadd.f32 %v49, %v199
    %v208 = vadd.f32 %v50, %v204
    %209 = vst [vmem:[#allocation7] sm:$0xff] %v207
    %210 = vst [vmem:[#allocation7 + $0x8] sm:$0xff] %v208
    // Predicated region
    $region30: #{tpu_custom_call.1} parent=1 // pred_check
      _
    $region31: #{tpu_custom_call.1} parent=1 // pred_check_branch
      %212 = sbr.rel (0) target = $region33
    $region32: #{tpu_custom_call.1} parent=1 // pred_region
      %s214 = ssub.s32 256, 256
      %215 = vsyncadd [#allocation4], %s214
      %s216 = sshll.u32 [#allocation7], 4
      %s217 = int_to_ptr.vmem [resolvable:$true] %s216
      %222 = dma.vmem_to_hbm [thread:$0]  %s217, 256, %s5, [#allocation4], 128, 128, 8
    $region33: #{tpu_custom_call.1} parent=1 // pred_fallthru
      _
    // Predicated region
    $region34: #{tpu_custom_call.1} parent=1 // pred_check
      _
    $region35: #{tpu_custom_call.1} parent=1 // pred_check_branch
      %224 = sbr.rel (0) target = $region37
    $region36: #{tpu_custom_call.1} parent=1 // pred_region
      %225 = dma.done [#allocation4], 256
    $region37: #{tpu_custom_call.1} parent=1 // pred_fallthru
      _
    %226 = vsyncpa [#allocation3], 1
    %227 = vsyncpa [#allocation6], 1
    %228 = vsyncpa [#allocation4], 1

</llo_original>
